<compile_context>
chip_gen: v7x
topology: tpu7x:2x2x1
jax: 0.10.0
libtpu: 0.0.40
codegen_flags: <defaults>
</compile_context>

<pallas_src>
import functools

import jax
import jax.numpy as jnp
from jax.experimental import pallas as pl
from jax.experimental.pallas import tpu as pltpu

LANES = 128
SUBLANES = 8


def _sigmoid_one_eup(x):
    # sigmoid(x) == 0.5*tanh(0.5*x) + 0.5: one EUP push (tanh) + 2 VALU ops,
    # instead of exp + divide / reciprocal (2 EUP pushes + extra VALU).
    return 0.5 * jnp.tanh(0.5 * x) + 0.5


def _dice_partial_kernel(x_ref, t_ref, inter_ref, sum_ref, *,
                         tile_rows, tiles_per_core, num_row_tiles,
                         valid_rows_last):
    c = pl.program_id(0)          # TensorCore split ("parallel" axis)
    j = pl.program_id(1)          # row-tile within this core's range

    @pl.when(j == 0)
    def _():
        inter_ref[...] = jnp.zeros_like(inter_ref)
        sum_ref[...] = jnp.zeros_like(sum_ref)

    sub = tile_rows // SUBLANES

    def accumulate(p, t):
        # Pure VPU vreg adds into (8,128) accumulators; the expensive
        # cross-lane/sublane reduce happens exactly once, in the wrapper.
        # TODO(synk): on v7x with bf16 inputs, if a post-de-mask profile still
        # shows VALU as the saturated slot, offload this row reduction to the
        # idle MXU via a ones-vector matmul.
        inter_ref[...] += jnp.sum((p * t).reshape(sub, SUBLANES, LANES), axis=0)
        sum_ref[...] += jnp.sum((p + t).reshape(sub, SUBLANES, LANES), axis=0)

    def hot_body():
        # Cast in-kernel so narrow dtypes (bf16 logits, bool/int8 targets)
        # stay narrow over the HBM->VMEM DMA.
        x = x_ref[...].astype(jnp.float32)
        t = t_ref[...].astype(jnp.float32)
        accumulate(_sigmoid_one_eup(x), t)

    if valid_rows_last == tile_rows:
        # Every block is full: the masked branch is statically elided.
        hot_body()
    else:
        logical_block = c * tiles_per_core + j
        is_tail = logical_block == num_row_tiles - 1

        @pl.when(jnp.logical_not(is_tail))
        def _():
            # Hot path: no iota, no compare, no select.
            hot_body()

        @pl.when(is_tail)
        def _():
            # Only the final partial block pays for the mask.  The padded
            # region of the partial block holds undefined VMEM data, so both
            # p and t must be masked (jnp.where is a select, so NaNs in the
            # garbage region are harmless).
            row_ids = jax.lax.broadcasted_iota(jnp.int32, (tile_rows, LANES), 0)
            valid = row_ids < valid_rows_last
            x = x_ref[...].astype(jnp.float32)
            t = t_ref[...].astype(jnp.float32)
            p = jnp.where(valid, _sigmoid_one_eup(x), 0.0)
            tm = jnp.where(valid, t, 0.0)
            accumulate(p, tm)


def _device_defaults():
    """(tile_rows, core_splits) tuned per TPU generation."""
    kind = ""
    try:
        kind = jax.devices()[0].device_kind.lower()
    except Exception:
        pass
    is_v5e = ("v5e" in kind) or ("v5 lite" in kind) or ("v5lite" in kind)
    # 4096 rows (2 MiB f32/input block) keeps v5e under its 16 MiB scoped
    # default; 8192 rows (4 MiB) on v6e/v7x amortizes per-step overhead.
    tile_rows = 4096 if is_v5e else 8192
    # Only v7x has 2 TensorCores per chip; elsewhere the split buys nothing.
    core_splits = 2 if "7" in kind else 1
    return tile_rows, core_splits


def _choose_tiling(rows_full, target_tile_rows, core_splits):
    """Pick tile_rows / grid so no block is ever duplicated across cores."""
    nt = max(1, pl.cdiv(rows_full, target_tile_rows))
    if core_splits > 1:
        if nt < core_splits:
            core_splits = 1
        else:
            nt = pl.cdiv(nt, core_splits) * core_splits
    tile_rows = max(SUBLANES,
                    pl.cdiv(pl.cdiv(rows_full, nt), SUBLANES) * SUBLANES)
    num_row_tiles = pl.cdiv(rows_full, tile_rows)
    if core_splits > 1 and num_row_tiles % core_splits != 0:
        core_splits = 1   # guarantee: never DMA a clamped/duplicated block
    tiles_per_core = num_row_tiles // core_splits
    return tile_rows, num_row_tiles, tiles_per_core, core_splits


def dice_loss(inputs, targets, smooth=1.0, tile_rows=None, core_splits=None):
    default_tile_rows, default_core_splits = _device_defaults()
    if tile_rows is None:
        tile_rows = default_tile_rows
    if core_splits is None:
        core_splits = default_core_splits

    x_flat = jnp.ravel(inputs)
    t_flat = jnp.ravel(targets)
    n = x_flat.shape[0]

    rows_full = n // LANES
    rem = n % LANES

    inter = jnp.float32(0.0)
    total = jnp.float32(0.0)

    if rows_full > 0:
        n_main = rows_full * LANES
        # Common NCHW case (n % 128 == 0): pure reshape, no copy.  Ragged
        # case: truncate to the full-row slab; the <=127-element tail is
        # added in the epilogue instead of concatenate-padding both inputs.
        x_main = x_flat if rem == 0 else x_flat[:n_main]
        t_main = t_flat if rem == 0 else t_flat[:n_main]
        x2 = x_main.reshape(rows_full, LANES)
        t2 = t_main.reshape(rows_full, LANES)

        tile_rows, num_row_tiles, tiles_per_core, core_splits = _choose_tiling(
            rows_full, tile_rows, core_splits)
        valid_rows_last = rows_full - (num_row_tiles - 1) * tile_rows

        kernel = functools.partial(
            _dice_partial_kernel,
            tile_rows=tile_rows,
            tiles_per_core=tiles_per_core,
            num_row_tiles=num_row_tiles,
            valid_rows_last=valid_rows_last,
        )

        def in_map(c, j):
            return (c * tiles_per_core + j, 0)

        acc_spec = pl.BlockSpec((None, SUBLANES, LANES), lambda c, j: (c, 0, 0))

        # Explicit scoped-VMEM budget: double-buffered inputs plus in-kernel
        # f32 temporaries scale with the block; keep a hard cap safely under
        # v7x's 64 MiB physical VMEM.
        block_bytes_f32 = tile_rows * LANES * 4
        vmem_limit = int(min(8 * block_bytes_f32 + (16 << 20), 56 << 20))

        # TODO(synk): only if an xprof trace on v7x still shows exposed DMA at
        # these block sizes, add pipeline_mode=pl.Buffered(3) to the in_specs.
        inter_parts, sum_parts = pl.pallas_call(
            kernel,
            out_shape=(
                jax.ShapeDtypeStruct((core_splits, SUBLANES, LANES), jnp.float32),
                jax.ShapeDtypeStruct((core_splits, SUBLANES, LANES), jnp.float32),
            ),
            grid_spec=pltpu.PrefetchScalarGridSpec(
                num_scalar_prefetch=0,
                grid=(core_splits, tiles_per_core),
                in_specs=[
                    pl.BlockSpec((tile_rows, LANES), in_map),
                    pl.BlockSpec((tile_rows, LANES), in_map),
                ],
                out_specs=[acc_spec, acc_spec],
            ),
            compiler_params=pltpu.CompilerParams(
                dimension_semantics=("parallel", "arbitrary"),
                vmem_limit_bytes=vmem_limit,
            ),
            cost_estimate=pl.CostEstimate(
                flops=8 * n_main,
                transcendentals=n_main,
                bytes_accessed=int(x2.size) * x2.dtype.itemsize
                + int(t2.size) * t2.dtype.itemsize
                + 2 * core_splits * SUBLANES * LANES * 4,
            ),
        )(x2, t2)

        inter = inter + jnp.sum(inter_parts)
        total = total + jnp.sum(sum_parts)

    if rem:
        # <=127-element lane tail: O(128) work, plain XLA.
        x_tail = x_flat[rows_full * LANES:].astype(jnp.float32)
        t_tail = t_flat[rows_full * LANES:].astype(jnp.float32)
        p_tail = jax.nn.sigmoid(x_tail)
        inter = inter + jnp.sum(p_tail * t_tail)
        total = total + jnp.sum(p_tail) + jnp.sum(t_tail)

    smooth = jnp.float32(smooth)
    return 1.0 - (2.0 * inter + smooth) / (total + smooth)


def dice_loss_ref(inputs, targets, smooth=1.0):
    p = jax.nn.sigmoid(inputs.astype(jnp.float32)).ravel()
    t = targets.astype(jnp.float32).ravel()
    inter = jnp.sum(p * t)
    return 1.0 - (2.0 * inter + smooth) / (jnp.sum(p) + jnp.sum(t) + smooth)


if __name__ == "__main__":
    key = jax.random.PRNGKey(0)
    k1, k2 = jax.random.split(key)
    # Segmentation-style logits/targets pair (NCHW).
    x = jax.random.normal(k1, (2, 4, 16, 16), dtype=jnp.float32)
    t = (jax.random.uniform(k2, (2, 4, 16, 16)) > 0.5).astype(jnp.float32)

    loss = jax.block_until_ready(dice_loss(x, t, smooth=1.0))
    ref = jax.block_until_ready(dice_loss_ref(x, t, smooth=1.0))

    assert jnp.allclose(loss, ref, atol=1e-5, rtol=1e-5), (loss, ref)
    print("KERNEL_OK")
</pallas_src>

<mosaic_0001>
module attributes {stable_mosaic.version = 11 : i64} {
  func.func @_dice_partial_kernel(%arg0: i32, %arg1: i32, %arg2: memref<16x128xf32, #tpu.memory_space<vmem>>, %arg3: memref<16x128xf32, #tpu.memory_space<vmem>>, %arg4: memref<1x8x128xf32, #tpu.memory_space<vmem>>, %arg5: memref<1x8x128xf32, #tpu.memory_space<vmem>>) attributes {dimension_semantics = [#tpu.dimension_semantics<parallel>, #tpu.dimension_semantics<arbitrary>], iteration_bounds = array<i64: 1, 1>, scalar_prefetch = 0 : i64, scratch_operands = 0 : i64, tpu.core_type = #tpu.core_type<tc>, window_params = [{transform_indices = @transform_0, window_bounds = array<i64: 16, 128>}, {transform_indices = @transform_1, window_bounds = array<i64: 16, 128>}, {transform_indices = @transform_2, window_bounds = array<i64: 1, 8, 128>}, {transform_indices = @transform_3, window_bounds = array<i64: 1, 8, 128>}]} {
    %c0_i32 = arith.constant 0 : i32
    %0 = arith.cmpi eq, %arg1, %c0_i32 : i32
    %1 = arith.extui %0 : i1 to i32
    %c0_i32_0 = arith.constant 0 : i32
    %2 = arith.cmpi ne, %1, %c0_i32_0 : i32
    scf.if %2 {
      %cst_20 = arith.constant 0.000000e+00 : f32
      %30 = vector.broadcast %cst_20 : f32 to vector<8x128xf32>
      %c0_21 = arith.constant 0 : index
      %c0_22 = arith.constant 0 : index
      %c0_23 = arith.constant 0 : index
      %31 = vector.load %arg4[%c0_21, %c0_22, %c0_23] : memref<1x8x128xf32, #tpu.memory_space<vmem>>, vector<1x8x128xf32>
      %32 = vector.shape_cast %31 : vector<1x8x128xf32> to vector<8x128xf32>
      %33 = vector.shape_cast %30 : vector<8x128xf32> to vector<1x8x128xf32>
      tpu.vector_store %arg4[%c0_21, %c0_22, %c0_23], %33 {strides = array<i32>} : memref<1x8x128xf32, #tpu.memory_space<vmem>>, vector<1x8x128xf32>,
      %cst_24 = arith.constant 0.000000e+00 : f32
      %34 = vector.broadcast %cst_24 : f32 to vector<8x128xf32>
      %c0_25 = arith.constant 0 : index
      %c0_26 = arith.constant 0 : index
      %c0_27 = arith.constant 0 : index
      %35 = vector.load %arg5[%c0_25, %c0_26, %c0_27] : memref<1x8x128xf32, #tpu.memory_space<vmem>>, vector<1x8x128xf32>
      %36 = vector.shape_cast %35 : vector<1x8x128xf32> to vector<8x128xf32>
      %37 = vector.shape_cast %34 : vector<8x128xf32> to vector<1x8x128xf32>
      tpu.vector_store %arg5[%c0_25, %c0_26, %c0_27], %37 {strides = array<i32>} : memref<1x8x128xf32, #tpu.memory_space<vmem>>, vector<1x8x128xf32>,
    } else {
    }
    %c0 = arith.constant 0 : index
    %c0_1 = arith.constant 0 : index
    %3 = vector.load %arg2[%c0, %c0_1] : memref<16x128xf32, #tpu.memory_space<vmem>>, vector<16x128xf32>
    %c0_2 = arith.constant 0 : index
    %c0_3 = arith.constant 0 : index
    %4 = vector.load %arg3[%c0_2, %c0_3] : memref<16x128xf32, #tpu.memory_space<vmem>>, vector<16x128xf32>
    %cst = arith.constant 5.000000e-01 : f32
    %5 = vector.broadcast %cst : f32 to vector<16x128xf32>
    %6 = arith.mulf %5, %3 : vector<16x128xf32>
    %7 = math.tanh %6 : vector<16x128xf32>
    %cst_4 = arith.constant 5.000000e-01 : f32
    %8 = vector.broadcast %cst_4 : f32 to vector<16x128xf32>
    %9 = arith.mulf %8, %7 : vector<16x128xf32>
    %cst_5 = arith.constant 5.000000e-01 : f32
    %10 = vector.broadcast %cst_5 : f32 to vector<16x128xf32>
    %11 = arith.addf %9, %10 : vector<16x128xf32>
    %c0_6 = arith.constant 0 : index
    %c0_7 = arith.constant 0 : index
    %c0_8 = arith.constant 0 : index
    %12 = vector.load %arg4[%c0_6, %c0_7, %c0_8] : memref<1x8x128xf32, #tpu.memory_space<vmem>>, vector<1x8x128xf32>
    %13 = vector.shape_cast %12 : vector<1x8x128xf32> to vector<8x128xf32>
    %14 = arith.mulf %11, %4 : vector<16x128xf32>
    %15 = vector.shape_cast %14 : vector<16x128xf32> to vector<2x8x128xf32>
    %cst_9 = arith.constant dense<0.000000e+00> : vector<8x128xf32>
    %16 = vector.multi_reduction <add>, %15, %cst_9 [0] : vector<2x8x128xf32> to vector<8x128xf32>
    %17 = arith.addf %13, %16 : vector<8x128xf32>
    %c0_10 = arith.constant 0 : index
    %c0_11 = arith.constant 0 : index
    %c0_12 = arith.constant 0 : index
    %18 = vector.load %arg4[%c0_10, %c0_11, %c0_12] : memref<1x8x128xf32, #tpu.memory_space<vmem>>, vector<1x8x128xf32>
    %19 = vector.shape_cast %18 : vector<1x8x128xf32> to vector<8x128xf32>
    %20 = vector.shape_cast %17 : vector<8x128xf32> to vector<1x8x128xf32>
    tpu.vector_store %arg4[%c0_10, %c0_11, %c0_12], %20 {strides = array<i32>} : memref<1x8x128xf32, #tpu.memory_space<vmem>>, vector<1x8x128xf32>,
    %c0_13 = arith.constant 0 : index
    %c0_14 = arith.constant 0 : index
    %c0_15 = arith.constant 0 : index
    %21 = vector.load %arg5[%c0_13, %c0_14, %c0_15] : memref<1x8x128xf32, #tpu.memory_space<vmem>>, vector<1x8x128xf32>
    %22 = vector.shape_cast %21 : vector<1x8x128xf32> to vector<8x128xf32>
    %23 = arith.addf %11, %4 : vector<16x128xf32>
    %24 = vector.shape_cast %23 : vector<16x128xf32> to vector<2x8x128xf32>
    %cst_16 = arith.constant dense<0.000000e+00> : vector<8x128xf32>
    %25 = vector.multi_reduction <add>, %24, %cst_16 [0] : vector<2x8x128xf32> to vector<8x128xf32>
    %26 = arith.addf %22, %25 : vector<8x128xf32>
    %c0_17 = arith.constant 0 : index
    %c0_18 = arith.constant 0 : index
    %c0_19 = arith.constant 0 : index
    %27 = vector.load %arg5[%c0_17, %c0_18, %c0_19] : memref<1x8x128xf32, #tpu.memory_space<vmem>>, vector<1x8x128xf32>
    %28 = vector.shape_cast %27 : vector<1x8x128xf32> to vector<8x128xf32>
    %29 = vector.shape_cast %26 : vector<8x128xf32> to vector<1x8x128xf32>
    tpu.vector_store %arg5[%c0_17, %c0_18, %c0_19], %29 {strides = array<i32>} : memref<1x8x128xf32, #tpu.memory_space<vmem>>, vector<1x8x128xf32>,
    return
  }
  func.func @transform_0(%arg0: i32, %arg1: i32) -> (i32, i32) {
    %c1_i32 = arith.constant 1 : i32
    %0 = arith.muli %arg0, %c1_i32 : i32
    %1 = arith.addi %0, %arg1 : i32
    %c0_i32 = arith.constant 0 : i32
    %c0_i32_0 = arith.constant 0 : i32
    return %1, %c0_i32 : i32, i32
  }
  func.func @transform_1(%arg0: i32, %arg1: i32) -> (i32, i32) {
    %c1_i32 = arith.constant 1 : i32
    %0 = arith.muli %arg0, %c1_i32 : i32
    %1 = arith.addi %0, %arg1 : i32
    %c0_i32 = arith.constant 0 : i32
    %c0_i32_0 = arith.constant 0 : i32
    return %1, %c0_i32 : i32, i32
  }
  func.func @transform_2(%arg0: i32, %arg1: i32) -> (i32, i32, i32) {
    %c0_i32 = arith.constant 0 : i32
    %c0_i32_0 = arith.constant 0 : i32
    %c0_i32_1 = arith.constant 0 : i32
    return %arg0, %c0_i32, %c0_i32_0 : i32, i32, i32
  }
  func.func @transform_3(%arg0: i32, %arg1: i32) -> (i32, i32, i32) {
    %c0_i32 = arith.constant 0 : i32
    %c0_i32_0 = arith.constant 0 : i32
    %c0_i32_1 = arith.constant 0 : i32
    return %arg0, %c0_i32, %c0_i32_0 : i32, i32, i32
  }
}

</mosaic_0001>

<llo_original>
// kernel: tpu_custom_call.1
$region0: #{tpu_custom_call.1}
  #allocation0 [shape = 'u32[]', space=smem, size = 0x4, offset = 0x4, fixed_abs, tag = 'smem constant byte address 0x4 - core index']
  #allocation1 [shape = 'u32[144,128]{1,0:T(1,128)}', space=vmem, size = 0x12000, scoped, tag = 'internal scratch']
  %s0 = inlined_call_operand.hbm [shape: f32[16,128], index: 0, kind: input, shape index: {}]
  %s1 = inlined_call_operand.hbm [shape: f32[16,128], index: 1, kind: input, shape index: {}]
  %s2 = inlined_call_operand.hbm [shape: f32[1,8,128], index: 2, kind: output, shape index: {0}]
  %s3 = inlined_call_operand.hbm [shape: f32[1,8,128], index: 3, kind: output, shape index: {1}]
  %4 = xla_tuple %s2, %s3
  %s5 = sld [smem:[#allocation0]]
  $region38: #{tpu_custom_call.1} parent=0
    _
  %s7 = ssub.s32 1, %s5
  %s8 = scalar_select 0, %s7, %s5
  $region1: #{tpu_custom_call.1} parent=0
    #allocation2 [shape = 'u8[8192]{0}', space=vmem, size = 0x2000, scoped, tag = 'input window, operand 0, single buffered']
    #allocation3 [shape = 's32[1]{0}', space=sflag, size = 0x4, scoped, tag = 'scoped memory for tpu_custom_call.1']
    #allocation4 [shape = 's32[1]{0}', space=sflag, size = 0x4, scoped, tag = 'scoped memory for tpu_custom_call.1']
    #allocation5 [shape = 'u8[8192]{0}', space=vmem, size = 0x2000, scoped, tag = 'input window, operand 1, single buffered']
    #allocation6 [shape = 's32[1]{0}', space=sflag, size = 0x4, scoped, tag = 'scoped memory for tpu_custom_call.1']
    #allocation7 [shape = 'u8[4096]{0}', space=vmem, size = 0x1000, scoped, tag = 'output window, operand 0, single buffered']
    #allocation8 [shape = 'u8[4096]{0}', space=vmem, size = 0x1000, scoped, tag = 'output window, operand 1, single buffered']
    #allocation9 [shape = 's32[1]{0}', space=sflag, size = 0x4, scoped, tag = 'scoped memory for tpu_custom_call.1']
    %9 = vsyncpa [#allocation3], 0
    %10 = vsyncpa [#allocation6], 0
    %11 = vsyncpa [#allocation4], 0
    %12 = vsyncpa [#allocation9], 0
    // Predicated region
    $region2: #{tpu_custom_call.1} parent=1 // pred_check
      _
    $region3: #{tpu_custom_call.1} parent=1 // pred_check_branch
      %14 = sbr.rel (0) target = $region5
    $region4: #{tpu_custom_call.1} parent=1 // pred_region
      %s15 = sadd.s32 0, 0
      %s16 = smul.u32 2, %s15
      %s18 = ssub.s32 256, 256
      %19 = vsyncadd [#allocation3], %s18
      %s20 = smul.addr %s16, 128
      %s21 = scalar_lea.hbm %s0, %s20
      %s22 = sshll.u32 [#allocation2], 4
      %s23 = int_to_ptr.vmem [resolvable:$true] %s22
      %28 = dma.hbm_to_vmem [thread:$0]  %s21, 256, %s23, [#allocation3], 128, 128, 8
    $region5: #{tpu_custom_call.1} parent=1 // pred_fallthru
      _
    // Predicated region
    $region6: #{tpu_custom_call.1} parent=1 // pred_check
      _
    $region7: #{tpu_custom_call.1} parent=1 // pred_check_branch
      %30 = sbr.rel (0) target = $region9
    $region8: #{tpu_custom_call.1} parent=1 // pred_region
      %s31 = sadd.s32 0, 0
      %s32 = smul.u32 2, %s31
      %s34 = ssub.s32 256, 256
      %35 = vsyncadd [#allocation6], %s34
      %s36 = smul.addr %s32, 128
      %s37 = scalar_lea.hbm %s1, %s36
      %s38 = sshll.u32 [#allocation5], 4
      %s39 = int_to_ptr.vmem [resolvable:$true] %s38
      %44 = dma.hbm_to_vmem [thread:$0]  %s37, 256, %s39, [#allocation6], 128, 128, 8
    $region9: #{tpu_custom_call.1} parent=1 // pred_fallthru
      _
    // Predicated region
    $region10: #{tpu_custom_call.1} parent=1 // pred_check
      _
    $region11: #{tpu_custom_call.1} parent=1 // pred_check_branch
      %46 = sbr.rel (0) target = $region13
    $region12: #{tpu_custom_call.1} parent=1 // pred_region
      %47 = dma.done [#allocation3], 256
    $region13: #{tpu_custom_call.1} parent=1 // pred_fallthru
      _
    // Predicated region
    $region14: #{tpu_custom_call.1} parent=1 // pred_check
      _
    $region15: #{tpu_custom_call.1} parent=1 // pred_check_branch
      %49 = sbr.rel (0) target = $region17
    $region16: #{tpu_custom_call.1} parent=1 // pred_region
      %50 = dma.done [#allocation6], 256
    $region17: #{tpu_custom_call.1} parent=1 // pred_fallthru
      _
    %s51 = sadd.s32 0, 0
    %s52 = smul.u32 2, %s51
    %s53 = sadd.s32 0, 0
    %s54 = smul.u32 2, %s53
    %p55 = scmp.eq.s32.totalorder 0, 0
    // Predicated region
    $region18: #{tpu_custom_call.1} parent=1 // pred_check
      %p56 = pneg %p55
    $region19: #{tpu_custom_call.1} parent=1 // pred_check_branch
      %58 = sbr.rel (%p56) target = $region21
    $region20: #{tpu_custom_call.1} parent=1 // pred_region
      %59 = vst [vmem:[#allocation7] sm:$0xff] 0.0
      %60 = vst [vmem:[#allocation8] sm:$0xff] 0.0
    $region21: #{tpu_custom_call.1} parent=1 // pred_fallthru
      _
    %v61 = vld [vmem:[#allocation2] sm:$0xff]
    %v62 = vld [vmem:[#allocation2 + $0x8] sm:$0xff]
    %v63 = vld [vmem:[#allocation5] sm:$0xff]
    %v64 = vld [vmem:[#allocation5 + $0x8] sm:$0xff]
    %v65 = vmul.f32 %v61, 0.5
    %v66 = vmul.f32 %v62, 0.5
    %v67 = vtanh.pop %v65
    %v68 = vtanh.pop %v66
    %v69 = vmul.f32 %v67, 0.5
    %v70 = vmul.f32 %v68, 0.5
    %v71 = vadd.f32 %v69, 0.5
    %v72 = vadd.f32 %v70, 0.5
    %v73 = vld [vmem:[#allocation7] sm:$0xff]
    %v74 = vmul.f32 %v71, %v63
    %v75 = vmul.f32 %v72, %v64
    %v76 = vadd.f32 %v74, %v75
    %v77 = vadd.f32 %v73, %v76
    %78 = vst [vmem:[#allocation7] sm:$0xff] %v77
    %v79 = vld [vmem:[#allocation8] sm:$0xff]
    %v80 = vadd.f32 %v71, %v63
    %v81 = vadd.f32 %v72, %v64
    %v82 = vadd.f32 %v80, %v81
    %v83 = vadd.f32 %v79, %v82
    %84 = vst [vmem:[#allocation8] sm:$0xff] %v83
    // Predicated region
    $region22: #{tpu_custom_call.1} parent=1 // pred_check
      _
    $region23: #{tpu_custom_call.1} parent=1 // pred_check_branch
      %86 = sbr.rel (0) target = $region25
    $region24: #{tpu_custom_call.1} parent=1 // pred_region
      %s88 = ssub.s32 128, 128
      %89 = vsyncadd [#allocation4], %s88
      %s91 = sshll.u32 [#allocation7], 4
      %s92 = int_to_ptr.vmem [resolvable:$true] %s91
      %94 = dma.vmem_to_hbm [thread:$0]  %s92, 128, %s2, [#allocation4]
    $region25: #{tpu_custom_call.1} parent=1 // pred_fallthru
      _
    // Predicated region
    $region26: #{tpu_custom_call.1} parent=1 // pred_check
      _
    $region27: #{tpu_custom_call.1} parent=1 // pred_check_branch
      %96 = sbr.rel (0) target = $region29
    $region28: #{tpu_custom_call.1} parent=1 // pred_region
      %s98 = ssub.s32 128, 128
      %99 = vsyncadd [#allocation9], %s98
      %s101 = sshll.u32 [#allocation8], 4
      %s102 = int_to_ptr.vmem [resolvable:$true] %s101
      %104 = dma.vmem_to_hbm [thread:$0]  %s102, 128, %s3, [#allocation9]
    $region29: #{tpu_custom_call.1} parent=1 // pred_fallthru
      _
    // Predicated region
    $region30: #{tpu_custom_call.1} parent=1 // pred_check
      _
    $region31: #{tpu_custom_call.1} parent=1 // pred_check_branch
      %106 = sbr.rel (0) target = $region33
    $region32: #{tpu_custom_call.1} parent=1 // pred_region
      %107 = dma.done [#allocation4], 128
    $region33: #{tpu_custom_call.1} parent=1 // pred_fallthru
      _
    // Predicated region
    $region34: #{tpu_custom_call.1} parent=1 // pred_check
      _
    $region35: #{tpu_custom_call.1} parent=1 // pred_check_branch
      %109 = sbr.rel (0) target = $region37
    $region36: #{tpu_custom_call.1} parent=1 // pred_region
      %110 = dma.done [#allocation9], 128
    $region37: #{tpu_custom_call.1} parent=1 // pred_fallthru
      _
    %111 = vsyncpa [#allocation3], 1
    %112 = vsyncpa [#allocation6], 1
    %113 = vsyncpa [#allocation4], 1
    %114 = vsyncpa [#allocation9], 1

</llo_original>
